<compile_context>
chip_gen: v5e
topology: v5e:2x2
jax: 0.10.0
libtpu: 0.0.40
codegen_flags: <defaults>
</compile_context>

<pallas_src>
import functools

import jax
import jax.numpy as jnp
from jax.experimental import pallas as pl
from jax.experimental.pallas import tpu as pltpu

EPS = 1e-5

_MAX_ROW_BLOCK = 512        # ~85% of HBM roofline; halves temp/spill pressure vs 1024
_TARGET_GRID_STEPS = 8      # enough steps for pipelining + both v7x TensorCores


def _round_up(v, m):
    return ((v + m - 1) // m) * m


@functools.lru_cache(maxsize=None)
def _vmem_budgets():
    """(block_budget_bytes, scoped_vmem_limit_bytes), generation-aware."""
    cap = None
    try:
        info = pltpu.get_tpu_info()
        cap = getattr(info, "vmem_capacity_bytes", None)
    except Exception:
        cap = None
    if cap is None:
        cap = 64 * 1024 * 1024  # unknown -> assume the smaller (v7x) VMEM
    if cap <= 64 * 1024 * 1024:
        # v7x: 64 MiB physical per TC -> keep headroom for f32 temps.
        return 14 * 1024 * 1024, 32 * 1024 * 1024
    # v5e / v6e: 128 MiB physical.
    return 24 * 1024 * 1024, 48 * 1024 * 1024


def _choose_row_block(n_rows, d_pad, itemsize, block_budget):
    """Row tile sized from the VMEM budget (double-buffered in+out blocks plus
    ~16 B/elem of f32 temporaries), capped at 512, multiple of 16, and shrunk
    so the grid has at least ~_TARGET_GRID_STEPS steps when N allows."""
    per_row = (2 * 2 * itemsize + 16) * d_pad     # 2x-buffered in+out + f32 temps
    rb = block_budget // max(per_row, 1)
    rb = min(rb, _MAX_ROW_BLOCK)

    min_rb = 16 if itemsize == 2 else 8           # bf16 native tile is (16, 128)

    # Guarantee enough grid steps for pipelining / megacore sharding.
    rb_steps = _round_up(pl.cdiv(n_rows, _TARGET_GRID_STEPS), 16)
    rb = min(rb, max(rb_steps, min_rb))

    # Don't exceed the (rounded-up) row count.
    rb = min(rb, _round_up(n_rows, min_rb))

    # Sublane-pack friendly alignment.
    if rb >= 16:
        rb = (rb // 16) * 16
    rb = max(rb, min_rb)
    return int(rb)


def _ln_kernel_bias(x_ref, w_ref, b_ref, o_ref, *, true_d):
    # x_ref: (R, Dp), w_ref/b_ref: (1, Dp), o_ref: (R, Dp)
    x = x_ref[...].astype(jnp.float32)
    d_pad = x.shape[-1]
    inv_d = 1.0 / true_d
    # Padded lanes are zero, so they contribute nothing to the sum.
    mean = jnp.sum(x, axis=-1, keepdims=True) * inv_d
    centered = x - mean
    if true_d != d_pad:
        lane = jax.lax.broadcasted_iota(jnp.int32, (1, d_pad), 1)
        centered = jnp.where(lane < true_d, centered, 0.0)
    var = jnp.sum(centered * centered, axis=-1, keepdims=True) * inv_d
    inv = jax.lax.rsqrt(var + EPS)
    w = w_ref[...].astype(jnp.float32)
    b = b_ref[...].astype(jnp.float32)
    o_ref[...] = (centered * inv * w + b).astype(o_ref.dtype)


def _ln_kernel_nobias(x_ref, w_ref, o_ref, *, true_d):
    x = x_ref[...].astype(jnp.float32)
    d_pad = x.shape[-1]
    inv_d = 1.0 / true_d
    mean = jnp.sum(x, axis=-1, keepdims=True) * inv_d
    centered = x - mean
    if true_d != d_pad:
        lane = jax.lax.broadcasted_iota(jnp.int32, (1, d_pad), 1)
        centered = jnp.where(lane < true_d, centered, 0.0)
    var = jnp.sum(centered * centered, axis=-1, keepdims=True) * inv_d
    inv = jax.lax.rsqrt(var + EPS)
    w = w_ref[...].astype(jnp.float32)
    o_ref[...] = (centered * inv * w).astype(o_ref.dtype)


@functools.partial(jax.jit, static_argnames=("has_bias",))
def layer_norm(x, weight, bias=None, *, has_bias=True):
    """LayerNorm over the last dim of `x` with scale `weight` and optional `bias`."""
    if has_bias and bias is None:
        raise ValueError("has_bias=True requires a bias array (got None).")
    use_bias = bool(has_bias)

    orig_shape = x.shape
    D = orig_shape[-1]
    N = 1
    for s in orig_shape[:-1]:
        N *= s

    x2 = x.reshape(N, D)
    w2 = weight.reshape(1, D)
    b2 = bias.reshape(1, D) if use_bias else None

    # Lane-dense output: pad the feature dim to a multiple of 128 if needed.
    D_pad = _round_up(D, 128)
    if D_pad != D:
        x2 = jnp.pad(x2, ((0, 0), (0, D_pad - D)))
        w2 = jnp.pad(w2, ((0, 0), (0, D_pad - D)))
        if use_bias:
            b2 = jnp.pad(b2, ((0, 0), (0, D_pad - D)))

    block_budget, vmem_limit = _vmem_budgets()
    itemsize = jnp.dtype(x.dtype).itemsize
    rb = _choose_row_block(N, D_pad, itemsize, block_budget)
    grid = (pl.cdiv(N, rb),)  # no row padding: boundary block is masked by Pallas

    row_spec = pl.BlockSpec((rb, D_pad), lambda i: (i, 0))
    param_spec = pl.BlockSpec((1, D_pad), lambda i: (0, 0))

    compiler_params = pltpu.CompilerParams(
        dimension_semantics=("parallel",),
        vmem_limit_bytes=vmem_limit,
    )

    if use_bias:
        out = pl.pallas_call(
            functools.partial(_ln_kernel_bias, true_d=D),
            out_shape=jax.ShapeDtypeStruct((N, D_pad), x.dtype),
            grid_spec=pltpu.PrefetchScalarGridSpec(
                num_scalar_prefetch=0,
                grid=grid,
                in_specs=[row_spec, param_spec, param_spec],
                out_specs=row_spec,
            ),
            compiler_params=compiler_params,
        )(x2, w2, b2)
    else:
        out = pl.pallas_call(
            functools.partial(_ln_kernel_nobias, true_d=D),
            out_shape=jax.ShapeDtypeStruct((N, D_pad), x.dtype),
            grid_spec=pltpu.PrefetchScalarGridSpec(
                num_scalar_prefetch=0,
                grid=grid,
                in_specs=[row_spec, param_spec],
                out_specs=row_spec,
            ),
            compiler_params=compiler_params,
        )(x2, w2)

    if D_pad != D:
        out = out[:, :D]
    return out.reshape(orig_shape)


if __name__ == "__main__":
    key = jax.random.PRNGKey(0)
    B, T, D = 2, 8, 32

    x = jax.random.normal(key, (B, T, D), dtype=jnp.float32)

    # nn.Parameter(torch.ones(D)) / torch.zeros(D): weight = ones, bias = zeros.
    weight = jnp.ones((D,), dtype=jnp.float32)
    bias = jnp.zeros((D,), dtype=jnp.float32)

    y = jax.block_until_ready(layer_norm(x, weight, bias, has_bias=True))

    # Pure-JAX reference check.
    mean = jnp.mean(x, axis=-1, keepdims=True)
    var = jnp.mean((x - mean) ** 2, axis=-1, keepdims=True)
    ref = (x - mean) * jax.lax.rsqrt(var + EPS) * weight + bias
    assert jnp.allclose(y, ref, atol=1e-5, rtol=1e-5), "mismatch vs reference (bias)"

    # bias=False path (specialized kernel).
    y_nb = jax.block_until_ready(layer_norm(x, weight, None, has_bias=False))
    ref_nb = (x - mean) * jax.lax.rsqrt(var + EPS) * weight
    assert jnp.allclose(y_nb, ref_nb, atol=1e-5, rtol=1e-5), "mismatch vs reference (no bias)"

    # Also exercise a lane-dense hot path (D multiple of 128, no padding) with
    # enough rows to run several grid steps.
    B2, T2, D2 = 4, 64, 256
    x_big = jax.random.normal(jax.random.PRNGKey(1), (B2, T2, D2), dtype=jnp.float32)
    w_big = jnp.ones((D2,), dtype=jnp.float32)
    b_big = jnp.zeros((D2,), dtype=jnp.float32)
    y_big = jax.block_until_ready(layer_norm(x_big, w_big, b_big, has_bias=True))
    mean_b = jnp.mean(x_big, axis=-1, keepdims=True)
    var_b = jnp.mean((x_big - mean_b) ** 2, axis=-1, keepdims=True)
    ref_big = (x_big - mean_b) * jax.lax.rsqrt(var_b + EPS) * w_big + b_big
    assert jnp.allclose(y_big, ref_big, atol=1e-5, rtol=1e-5), "mismatch vs reference (big)"

    print("KERNEL_OK")
</pallas_src>

<mosaic_0001>
module attributes {stable_mosaic.version = 11 : i64} {
  func.func @_ln_kernel_bias(%arg0: i32, %arg1: memref<16x128xf32, #tpu.memory_space<vmem>>, %arg2: memref<1x128xf32, #tpu.memory_space<vmem>>, %arg3: memref<1x128xf32, #tpu.memory_space<vmem>>, %arg4: memref<16x128xf32, #tpu.memory_space<vmem>>) attributes {dimension_semantics = [#tpu.dimension_semantics<parallel>], iteration_bounds = array<i64: 1>, scalar_prefetch = 0 : i64, scratch_operands = 0 : i64, tpu.core_type = #tpu.core_type<tc>, window_params = [{transform_indices = @transform_0, window_bounds = array<i64: 16, 128>}, {pipeline_mode = #tpu.pipeline_mode<synchronous>, transform_indices = @transform_1, window_bounds = array<i64: 1, 128>}, {pipeline_mode = #tpu.pipeline_mode<synchronous>, transform_indices = @transform_2, window_bounds = array<i64: 1, 128>}, {transform_indices = @transform_3, window_bounds = array<i64: 16, 128>}]} {
    %c0 = arith.constant 0 : index
    %c0_0 = arith.constant 0 : index
    %0 = vector.load %arg1[%c0, %c0_0] : memref<16x128xf32, #tpu.memory_space<vmem>>, vector<16x128xf32>
    %cst = arith.constant dense<0.000000e+00> : vector<16xf32>
    %1 = vector.multi_reduction <add>, %0, %cst [1] : vector<16x128xf32> to vector<16xf32>
    %2 = vector.shape_cast %1 : vector<16xf32> to vector<16x1xf32>
    %cst_1 = arith.constant 3.125000e-02 : f32
    %3 = vector.broadcast %cst_1 : f32 to vector<16x1xf32>
    %4 = arith.mulf %2, %3 : vector<16x1xf32>
    %5 = vector.broadcast %4 : vector<16x1xf32> to vector<16x128xf32>
    %6 = arith.subf %0, %5 : vector<16x128xf32>
    %7 = tpu.iota {dimensions = array<i32: 1>} : vector<1x128xi32>
    %c32_i32 = arith.constant 32 : i32
    %8 = vector.broadcast %c32_i32 : i32 to vector<1x128xi32>
    %9 = arith.cmpi slt, %7, %8 : vector<1x128xi32>
    %cst_2 = arith.constant 0.000000e+00 : f32
    %10 = vector.shape_cast %9 : vector<1x128xi1> to vector<1x128xi1>
    %11 = vector.broadcast %10 : vector<1x128xi1> to vector<16x128xi1>
    %12 = vector.broadcast %cst_2 : f32 to vector<16x128xf32>
    %13 = arith.select %11, %6, %12 : vector<16x128xi1>, vector<16x128xf32>
    %14 = arith.mulf %13, %13 : vector<16x128xf32>
    %cst_3 = arith.constant dense<0.000000e+00> : vector<16xf32>
    %15 = vector.multi_reduction <add>, %14, %cst_3 [1] : vector<16x128xf32> to vector<16xf32>
    %16 = vector.shape_cast %15 : vector<16xf32> to vector<16x1xf32>
    %cst_4 = arith.constant 3.125000e-02 : f32
    %17 = vector.broadcast %cst_4 : f32 to vector<16x1xf32>
    %18 = arith.mulf %16, %17 : vector<16x1xf32>
    %cst_5 = arith.constant 9.99999974E-6 : f32
    %19 = vector.broadcast %cst_5 : f32 to vector<16x1xf32>
    %20 = arith.addf %18, %19 : vector<16x1xf32>
    %21 = math.rsqrt %20 : vector<16x1xf32>
    %c0_6 = arith.constant 0 : index
    %c0_7 = arith.constant 0 : index
    %22 = vector.load %arg2[%c0_6, %c0_7] : memref<1x128xf32, #tpu.memory_space<vmem>>, vector<1x128xf32>
    %c0_8 = arith.constant 0 : index
    %c0_9 = arith.constant 0 : index
    %23 = vector.load %arg3[%c0_8, %c0_9] : memref<1x128xf32, #tpu.memory_space<vmem>>, vector<1x128xf32>
    %24 = vector.broadcast %21 : vector<16x1xf32> to vector<16x128xf32>
    %25 = arith.mulf %13, %24 : vector<16x128xf32>
    %26 = vector.broadcast %22 : vector<1x128xf32> to vector<16x128xf32>
    %27 = arith.mulf %25, %26 : vector<16x128xf32>
    %28 = vector.broadcast %23 : vector<1x128xf32> to vector<16x128xf32>
    %29 = arith.addf %27, %28 : vector<16x128xf32>
    %c0_10 = arith.constant 0 : index
    %c0_11 = arith.constant 0 : index
    %30 = vector.load %arg4[%c0_10, %c0_11] : memref<16x128xf32, #tpu.memory_space<vmem>>, vector<16x128xf32>
    tpu.vector_store %arg4[%c0_10, %c0_11], %29 {strides = array<i32>} : memref<16x128xf32, #tpu.memory_space<vmem>>, vector<16x128xf32>,
    return
  }
  func.func @transform_0(%arg0: i32) -> (i32, i32) {
    %c0_i32 = arith.constant 0 : i32
    %c0_i32_0 = arith.constant 0 : i32
    return %arg0, %c0_i32 : i32, i32
  }
  func.func @transform_1(%arg0: i32) -> (i32, i32) {
    %c0_i32 = arith.constant 0 : i32
    %c0_i32_0 = arith.constant 0 : i32
    %c0_i32_1 = arith.constant 0 : i32
    return %c0_i32, %c0_i32_0 : i32, i32
  }
  func.func @transform_2(%arg0: i32) -> (i32, i32) {
    %c0_i32 = arith.constant 0 : i32
    %c0_i32_0 = arith.constant 0 : i32
    %c0_i32_1 = arith.constant 0 : i32
    return %c0_i32, %c0_i32_0 : i32, i32
  }
  func.func @transform_3(%arg0: i32) -> (i32, i32) {
    %c0_i32 = arith.constant 0 : i32
    %c0_i32_0 = arith.constant 0 : i32
    return %arg0, %c0_i32 : i32, i32
  }
}

</mosaic_0001>

<llo_original>
// kernel: layer_norm.1
$region0: #{layer_norm.1}
  #allocation0 [shape = 'u32[]', space=smem, size = 0x4, offset = 0x4, fixed_abs, tag = 'smem constant byte address 0x4 - core index']
  #allocation1 [shape = 'u32[72,128]{1,0:T(1,128)}', space=vmem, size = 0x9000, scoped, tag = 'internal scratch']
  %s0 = inlined_call_operand.vmem [shape: f32[16,128], index: 0, kind: input, shape index: {}]
  %s1 = inlined_call_operand.vmem [shape: f32[1,128], index: 1, kind: input, shape index: {}]
  %s2 = inlined_call_operand.vmem [shape: f32[1,128], index: 2, kind: input, shape index: {}]
  %s3 = inlined_call_operand.vmem [shape: f32[16,128], index: 3, kind: output, shape index: {}]
  %s4 = sld [smem:[#allocation0]]
  $region22: #{layer_norm.1} parent=0
    _
  %s6 = ssub.s32 1, %s4
  %s7 = scalar_select 0, %s6, %s4
  // Predicated region
  $region2: #{layer_norm.1} parent=0 // pred_check
    _
  $region3: #{layer_norm.1} parent=0 // pred_check_branch
    %9 = sbr.rel (0) target = $region5
  $region4: #{layer_norm.1} parent=0 // pred_region
    _
  $region5: #{layer_norm.1} parent=0 // pred_fallthru
    _
  // Predicated region
  $region6: #{layer_norm.1} parent=0 // pred_check
    _
  $region7: #{layer_norm.1} parent=0 // pred_check_branch
    %11 = sbr.rel (0) target = $region9
  $region8: #{layer_norm.1} parent=0 // pred_region
    _
  $region9: #{layer_norm.1} parent=0 // pred_fallthru
    _
  // Predicated region
  $region10: #{layer_norm.1} parent=0 // pred_check
    _
  $region11: #{layer_norm.1} parent=0 // pred_check_branch
    %13 = sbr.rel (0) target = $region13
  $region12: #{layer_norm.1} parent=0 // pred_region
    _
  $region13: #{layer_norm.1} parent=0 // pred_fallthru
    _
  %v14 = vld [vmem:[%s0] sm:$0xff]
  %v15 = vld [vmem:[%s0 + $0x8] sm:$0xff]
  %16 = vadd.xlane.f32.xlu0 %v14
  %v17 = vpop.xlane.xlu0 %16
  %18 = vadd.xlane.f32.xlu0 %v15
  %v19 = vpop.xlane.xlu0 %18
  %v20 = vmul.f32 %v17, 0.03125
  %v21 = vmul.f32 %v19, 0.03125
  %v22 = vsub.f32 %v14, %v20
  %v23 = vsub.f32 %v15, %v21
  %v24 = vlaneseq
  %v25 = vand.u32 %v24, 127
  %vm26 = vcmp.lt.s32.totalorder %v25, 32
  %v27 = vsel %vm26, 1, 0
  %vm28 = vcmp.eq.s32.totalorder %v27, 1
  %v29 = vsel %vm28, %v22, 0.0
  %v30 = vsel %vm28, %v23, 0.0
  %v31 = vmul.f32 %v29, %v29
  %v32 = vmul.f32 %v30, %v30
  %33 = vadd.xlane.f32.xlu0 %v31
  %v34 = vpop.xlane.xlu0 %33
  %35 = vadd.xlane.f32.xlu0 %v32
  %v36 = vpop.xlane.xlu0 %35
  %v37 = vmul.f32 %v34, 0.03125
  %v38 = vmul.f32 %v36, 0.03125
  %v39 = vadd.f32 %v37, 1e-05
  %v40 = vadd.f32 %v38, 1e-05
  %v41 = vrsqrt.pop %v39
  %v42 = vmul.f32 %v41, %v39
  %v43 = vmul.f32 %v42, %v41
  %v44 = vmul.f32 0.5, %v43
  %v45 = vsub.f32 1.5, %v44
  %v46 = vmul.f32 %v41, %v45
  %vm47 = vweird.f32 %v39
  %vm48 = vweird.f32 %v41
  %vm49 = vmor %vm47, %vm48
  %v50 = vsel %vm49, %v41, %v46
  %v51 = vrsqrt.pop %v40
  %v52 = vmul.f32 %v51, %v40
  %v53 = vmul.f32 %v52, %v51
  %v54 = vmul.f32 0.5, %v53
  %v55 = vsub.f32 1.5, %v54
  %v56 = vmul.f32 %v51, %v55
  %vm57 = vweird.f32 %v40
  %vm58 = vweird.f32 %v51
  %vm59 = vmor %vm57, %vm58
  %v60 = vsel %vm59, %v51, %v56
  %v61 = vld [vmem:[%s1] sm:$0x1]
  %v62 = vld [vmem:[%s2] sm:$0x1]
  %v63 = vmul.f32 %v29, %v50
  %v64 = vmul.f32 %v30, %v60
  %v66 = vperm.slane %v61, 0
  %v68 = vmul.f32 %v63, %v66
  %v69 = vmul.f32 %v64, %v66
  %v71 = vperm.slane %v62, 0
  %v73 = vadd.f32 %v68, %v71
  %v74 = vadd.f32 %v69, %v71
  %75 = vst [vmem:[%s3] sm:$0xff] %v73
  %76 = vst [vmem:[%s3 + $0x8] sm:$0xff] %v74
  // Predicated region
  $region14: #{layer_norm.1} parent=0 // pred_check
    _
  $region15: #{layer_norm.1} parent=0 // pred_check_branch
    %78 = sbr.rel (0) target = $region17
  $region16: #{layer_norm.1} parent=0 // pred_region
    _
  $region17: #{layer_norm.1} parent=0 // pred_fallthru
    _
  // Predicated region
  $region18: #{layer_norm.1} parent=0 // pred_check
    _
  $region19: #{layer_norm.1} parent=0 // pred_check_branch
    %80 = sbr.rel (0) target = $region21
  $region20: #{layer_norm.1} parent=0 // pred_region
    _
  $region21: #{layer_norm.1} parent=0 // pred_fallthru
    _

</llo_original>
